<compile_context>
chip_gen: v6e
topology: v6e:2x2x1
jax: 0.10.0
libtpu: 0.0.40
codegen_flags: <defaults>
</compile_context>

<pallas_src>
import jax
import jax.numpy as jnp
from jax.experimental import pallas as pl
from jax.experimental.pallas import tpu as pltpu


def _round_up(x, m):
    return ((x + m - 1) // m) * m


def _pick_batch_tile(b, align):
    """Small batches: just sublane-align (no padding to a huge tile).
    Large batches: 512-row tiles (near HBM roofline, >=2 tiles for megacore)."""
    b_aligned = _round_up(max(b, align), align)
    return b_aligned if b_aligned <= 512 else 512


# ---------------------------------------------------------------------------
# Kernel 1 (pre-backbone): gen_attention_mask
#   mask[b, s] = 1.0 if s < valid_length[b] else 0.0
# ---------------------------------------------------------------------------
def mask_kernel(vl_ref, mask_ref):
    tb, ts = mask_ref.shape
    j = pl.program_id(1)                                    # sequence tile
    pos = jax.lax.broadcasted_iota(jnp.int32, (tb, ts), 1) + j * ts
    # vl_ref is a (tb, 1) int32 column; broadcasts over the lane axis.
    mask_ref[...] = (pos < vl_ref[...]).astype(mask_ref.dtype)


def gen_attention_mask(valid_length, seq_len, *, mask_dtype=jnp.bfloat16):
    """Returns the attention mask [B, seq_len] (bf16; values exactly 0/1)."""
    B = valid_length.shape[0]
    TB = _pick_batch_tile(B, 16)            # 16-row sublane tile for bf16 mask
    B_pad = _round_up(B, TB)
    S_pad = _round_up(max(seq_len, 128), 128)
    # Second grid axis over the sequence for long S (keeps VMEM per step small
    # on v7x/v5e instead of widening the batch tile).
    TS = 128
    for cand in (2048, 1024, 512, 256):
        if S_pad % cand == 0:
            TS = cand
            break

    vl = jnp.zeros((B_pad, 1), jnp.int32).at[:B, 0].set(
        valid_length.astype(jnp.int32))

    nb, ns = B_pad // TB, S_pad // TS
    mask_p = pl.pallas_call(
        mask_kernel,
        out_shape=jax.ShapeDtypeStruct((B_pad, S_pad), mask_dtype),
        grid=(nb, ns),
        in_specs=[pl.BlockSpec((TB, 1), lambda i, j: (i, 0))],
        out_specs=pl.BlockSpec((TB, TS), lambda i, j: (i, j)),
        compiler_params=pltpu.CompilerParams(
            dimension_semantics=("parallel", "parallel"),
            vmem_limit_bytes=32 * 1024 * 1024),
    )(vl)
    # Padded rows (>= B) are never valid; always slice before use.
    return mask_p[:B, :seq_len]


# ---------------------------------------------------------------------------
# Kernel 2 (post-backbone): sigmoid( relu(pooler @ W1 + b1) . w2 + b2 )
# ---------------------------------------------------------------------------
def head_kernel(pooler_ref, w1_ref, b1_ref, w2_ref, b2_ref, score_ref):
    # bf16 x bf16 on the MXU with f32 accumulation.
    h = jnp.dot(pooler_ref[...], w1_ref[...],
                preferred_element_type=jnp.float32)          # [TB, 128]
    h = jnp.maximum(h + b1_ref[...], 0.0)                    # bias + ReLU (VPU)
    # lin2 (128 -> 1): VPU multiply + lane reduce, b2 scalar from SMEM.
    o = jnp.sum(h * w2_ref[...], axis=-1) + b2_ref[0]        # [TB]
    score_ref[...] = jax.nn.sigmoid(o)[None, :]               # [1, TB] lane-dense


def regression_head(pooler, w1, b1, w2, b2):
    """Returns sigmoid scores [B, 1] float32."""
    B, H = pooler.shape
    HID = w1.shape[1]                        # 128
    TB = _pick_batch_tile(B, 16)             # bf16 pooler -> 16-row alignment
    B_pad = _round_up(B, TB)

    # bf16 activations/weights halve DMA bytes and run at native MXU rate.
    pooler_p = jnp.zeros((B_pad, H), jnp.bfloat16).at[:B, :].set(
        pooler.astype(jnp.bfloat16))
    w1_bf = w1.astype(jnp.bfloat16)
    b1_row = b1.reshape(1, HID).astype(jnp.float32)
    w2_row = w2.reshape(1, HID).astype(jnp.float32)          # [128,1] -> [1,128]
    b2_s = b2.reshape(1,).astype(jnp.float32)                # 1-D SMEM scalar

    nb = B_pad // TB
    score_p = pl.pallas_call(
        head_kernel,
        out_shape=jax.ShapeDtypeStruct((1, B_pad), jnp.float32),
        grid=(nb,),
        in_specs=[
            pl.BlockSpec((TB, H), lambda i: (i, 0)),          # pooler tile (bf16)
            pl.BlockSpec((H, HID), lambda i: (0, 0)),         # W1 (bf16, constant)
            pl.BlockSpec((1, HID), lambda i: (0, 0)),         # b1
            pl.BlockSpec((1, HID), lambda i: (0, 0)),         # w2 row
            pl.BlockSpec(memory_space=pltpu.MemorySpace.SMEM),  # b2 scalar
        ],
        out_specs=pl.BlockSpec((1, TB), lambda i: (0, i)),    # score lanes
        compiler_params=pltpu.CompilerParams(
            dimension_semantics=("parallel",),
            vmem_limit_bytes=32 * 1024 * 1024),
    )(pooler_p, w1_bf, b1_row, w2_row, b2_s)

    # Lanes >= B hold sigmoid(garbage from zero-padded rows); slice them off.
    return score_p[0, :B].reshape(B, 1)


# ---------------------------------------------------------------------------
# Full forward (dr_rate=None => no dropout, matching default ctor args)
# ---------------------------------------------------------------------------
def bert_regressor_forward(token_ids, valid_length, segment_ids,
                           pooler, w1, b1, w2, b2):
    B, S = token_ids.shape
    attention_mask = gen_attention_mask(valid_length, S)
    # TODO(synk): attention_mask + segment_ids feed the external BERT backbone
    # (not translated); `pooler` stands in for its pooled output.
    del segment_ids, attention_mask
    return regression_head(pooler, w1, b1, w2, b2)


if __name__ == "__main__":
    key = jax.random.PRNGKey(0)
    B, S, H, HID = 2, 8, 768, 128
    k_tok, k_pool, k_w1, k_w2 = jax.random.split(key, 4)

    token_ids = jax.random.randint(k_tok, (B, S), 0, 1000, dtype=jnp.int32)
    valid_length = jnp.array([5, 3], dtype=jnp.int32)
    segment_ids = jnp.zeros((B, S), dtype=jnp.int32)

    # Synthetic BERT pooler output (see TODO(synk) above).
    pooler = jax.random.normal(k_pool, (B, H), dtype=jnp.float32)

    # Head parameters (lin1: H->128, lin2: 128->1), PyTorch-equivalent values.
    w1 = jax.random.normal(k_w1, (H, HID), dtype=jnp.float32) * 0.02
    b1 = jnp.zeros((HID,), dtype=jnp.float32)
    w2 = jax.random.normal(k_w2, (HID, 1), dtype=jnp.float32) * 0.02
    b2 = jnp.zeros((1,), dtype=jnp.float32)

    mask = gen_attention_mask(valid_length, S)
    score = regression_head(pooler, w1, b1, w2, b2)
    out = bert_regressor_forward(token_ids, valid_length, segment_ids,
                                 pooler, w1, b1, w2, b2)
    jax.block_until_ready((mask, score, out))

    # Plain-JAX reference. The kernel computes lin1 in bf16 (f32 accumulation),
    # so the reference uses the same bf16-rounded inputs for a tight check.
    ref_mask = (jnp.arange(S)[None, :] < valid_length[:, None]).astype(jnp.float32)
    pooler_bf = pooler.astype(jnp.bfloat16).astype(jnp.float32)
    w1_bf = w1.astype(jnp.bfloat16).astype(jnp.float32)
    ref_h = jnp.maximum(
        jnp.dot(pooler_bf, w1_bf, precision=jax.lax.Precision.HIGHEST)
        + b1[None, :], 0.0)
    ref_out = jax.nn.sigmoid(
        jnp.sum(ref_h * w2.reshape(1, -1), axis=-1, keepdims=True) + b2)

    assert mask.shape == (B, S)
    assert jnp.array_equal(mask.astype(jnp.float32), ref_mask)
    assert out.shape == (B, 1) and score.shape == (B, 1)
    assert jnp.allclose(score, ref_out, atol=2e-3, rtol=2e-3)
    assert jnp.allclose(out, ref_out, atol=2e-3, rtol=2e-3)

    print("KERNEL_OK")
</pallas_src>

<mosaic_0001>
module attributes {stable_mosaic.version = 11 : i64} {
  func.func @mask_kernel(%arg0: i32, %arg1: i32, %arg2: memref<16x1xi32, #tpu.memory_space<vmem>>, %arg3: memref<16x128xbf16, #tpu.memory_space<vmem>>) attributes {dimension_semantics = [#tpu.dimension_semantics<parallel>, #tpu.dimension_semantics<parallel>], iteration_bounds = array<i64: 1, 1>, scalar_prefetch = 0 : i64, scratch_operands = 0 : i64, tpu.core_type = #tpu.core_type<tc>, window_params = [{transform_indices = @transform_0, window_bounds = array<i64: 16, 1>}, {transform_indices = @transform_1, window_bounds = array<i64: 16, 128>}]} {
    %0 = tpu.iota {dimensions = array<i32: 1>} : vector<16x128xi32>
    %c128_i32 = arith.constant 128 : i32
    %1 = arith.muli %arg1, %c128_i32 : i32
    %2 = vector.broadcast %1 : i32 to vector<16x128xi32>
    %3 = arith.addi %0, %2 : vector<16x128xi32>
    %c0 = arith.constant 0 : index
    %c0_0 = arith.constant 0 : index
    %4 = vector.load %arg2[%c0, %c0_0] : memref<16x1xi32, #tpu.memory_space<vmem>>, vector<16x1xi32>
    %5 = vector.broadcast %4 : vector<16x1xi32> to vector<16x128xi32>
    %6 = arith.cmpi slt, %3, %5 : vector<16x128xi32>
    %7 = arith.extui %6 : vector<16x128xi1> to vector<16x128xi32>
    %8 = arith.sitofp %7 : vector<16x128xi32> to vector<16x128xf32>
    %9 = arith.truncf %8 : vector<16x128xf32> to vector<16x128xbf16>
    %c0_1 = arith.constant 0 : index
    %c0_2 = arith.constant 0 : index
    %10 = vector.load %arg3[%c0_1, %c0_2] : memref<16x128xbf16, #tpu.memory_space<vmem>>, vector<16x128xbf16>
    tpu.vector_store %arg3[%c0_1, %c0_2], %9 {strides = array<i32>} : memref<16x128xbf16, #tpu.memory_space<vmem>>, vector<16x128xbf16>,
    return
  }
  func.func @transform_0(%arg0: i32, %arg1: i32) -> (i32, i32) {
    %c0_i32 = arith.constant 0 : i32
    %c0_i32_0 = arith.constant 0 : i32
    return %arg0, %c0_i32 : i32, i32
  }
  func.func @transform_1(%arg0: i32, %arg1: i32) -> (i32, i32) {
    %c0_i32 = arith.constant 0 : i32
    return %arg0, %arg1 : i32, i32
  }
}

</mosaic_0001>

<llo_original>
// kernel: tpu_custom_call.1
$region0: #{tpu_custom_call.1}
  #allocation0 [shape = 'u32[]', space=smem, size = 0x4, offset = 0x4, fixed_abs, tag = 'smem constant byte address 0x4 - core index']
  #allocation1 [shape = 'u32[144,128]{1,0:T(1,128)}', space=vmem, size = 0x12000, scoped, tag = 'internal scratch']
  %s0 = inlined_call_operand.vmem [shape: s32[16,1], index: 0, kind: input, shape index: {}]
  %s1 = inlined_call_operand.hbm [shape: bf16[16,128], index: 1, kind: output, shape index: {}]
  %s2 = sld [smem:[#allocation0]]
  $region14: #{tpu_custom_call.1} parent=0
    _
  %s4 = ssub.s32 1, %s2
  %s5 = scalar_select 0, %s4, %s2
  $region1: #{tpu_custom_call.1} parent=0
    #allocation2 [shape = 'u8[4096]{0}', space=vmem, size = 0x1000, scoped, tag = 'output window, operand 0, single buffered']
    #allocation3 [shape = 's32[1]{0}', space=sflag, size = 0x4, scoped, tag = 'scoped memory for tpu_custom_call.1']
    %6 = vsyncpa [#allocation3], 0
    // Predicated region
    $region2: #{tpu_custom_call.1} parent=1 // pred_check
      _
    $region3: #{tpu_custom_call.1} parent=1 // pred_check_branch
      %8 = sbr.rel (0) target = $region5
    $region4: #{tpu_custom_call.1} parent=1 // pred_region
      _
    $region5: #{tpu_custom_call.1} parent=1 // pred_fallthru
      _
    %v9 = vlaneseq
    %v10 = vand.u32 %v9, 127
    %s11 = smul.u32 0, 128
    %v12 = vstv %s11
    %v13 = vadd.s32 %v10, %v12
    %v14 = vld [vmem:[%s0] sm:$0xff]
    %v15 = vld [vmem:[%s0 + $0x8] sm:$0xff]
    %16 = vset.pattern.permute.xlu0 0
    %17 = vperm.xlu0 %16, %v14
    %v18 = vpop.permute.xlu0 %17
    %19 = vset.pattern.permute.xlu0 0
    %20 = vperm.xlu0 %19, %v15
    %v21 = vpop.permute.xlu0 %20
    %vm22 = vcmp.lt.s32.totalorder %v13, %v18
    %vm23 = vcmp.lt.s32.totalorder %v13, %v21
    %v24 = vsel %vm22, 1, 0
    %v25 = vsel %vm23, 1, 0
    %v26 = vcvt.s32.f32 %v24
    %v27 = vcvt.s32.f32 %v25
    %v28 = vpack.c.bf16 %v27, %v26
    %v30 = vunpack.c.l.b16 %v28
    %v31 = vunpack.c.h.b16 %v28
    %v32 = vpack.c.b16 %v30, %v30
    %v33 = vpack.c.b16 %v31, %v31
    %36 = vst [vmem:[#allocation2] sm:$0xf] %v32
    %37 = vst [vmem:[#allocation2 + $0x4] sm:$0xf] %v33
    // Predicated region
    $region6: #{tpu_custom_call.1} parent=1 // pred_check
      _
    $region7: #{tpu_custom_call.1} parent=1 // pred_check_branch
      %39 = sbr.rel (0) target = $region9
    $region8: #{tpu_custom_call.1} parent=1 // pred_region
      %s41 = ssub.s32 128, 128
      %42 = vsyncadd [#allocation3], %s41
      %s43 = sshll.u32 [#allocation2], 4
      %s44 = int_to_ptr.vmem [resolvable:$true] %s43
      %49 = dma.vmem_to_hbm [thread:$0]  %s44, 128, %s1, [#allocation3], 64, 64, 4
    $region9: #{tpu_custom_call.1} parent=1 // pred_fallthru
      _
    // Predicated region
    $region10: #{tpu_custom_call.1} parent=1 // pred_check
      _
    $region11: #{tpu_custom_call.1} parent=1 // pred_check_branch
      %51 = sbr.rel (0) target = $region13
    $region12: #{tpu_custom_call.1} parent=1 // pred_region
      %52 = dma.done [#allocation3], 128
    $region13: #{tpu_custom_call.1} parent=1 // pred_fallthru
      _
    %53 = vsyncpa [#allocation3], 1

</llo_original>
